<compile_context>
chip_gen: v6e
topology: v6e:2x2x1
jax: 0.10.0
libtpu: 0.0.40
codegen_flags: <defaults>
</compile_context>

<pallas_src>
import functools

import jax
import jax.numpy as jnp
from jax.experimental import pallas as pl
from jax.experimental.pallas import tpu as pltpu

_SQRT_2_OVER_PI = 0.7978845608028654


def _gelu_tanh(h):
    # GELU, tanh approximation (matches the custom GELU in my_gpt.py / GPT-2):
    #   0.5 * x * (1 + tanh(sqrt(2/pi) * (x + 0.044715 * x^3)))
    return 0.5 * h * (1.0 + jnp.tanh(_SQRT_2_OVER_PI * (h + 0.044715 * h * h * h)))


# ----------------------------- kernels --------------------------------------


def _ffn_fused_kernel(x_ref, w1_ref, b1_ref, w2_ref, b2_ref, o_ref):
    """Weights fully resident in VMEM; one dot -> GELU -> dot per token tile."""
    h = jnp.dot(x_ref[...], w1_ref[...], preferred_element_type=jnp.float32)
    h = h + b1_ref[...].astype(jnp.float32)
    g = _gelu_tanh(h)
    out = jnp.dot(g.astype(w2_ref.dtype), w2_ref[...],
                  preferred_element_type=jnp.float32)
    o_ref[...] = (out + b2_ref[...].astype(jnp.float32)).astype(o_ref.dtype)


def _ffn_tiled_f32out_kernel(x_ref, w1_ref, b1_ref, w2_ref, b2_ref, o_ref):
    """Hidden-dim chunked path, f32 output: accumulate straight into o_ref
    (output block index is constant over k, so the tile stays VMEM-resident)."""
    k = pl.program_id(1)

    @pl.when(k == 0)
    def _():
        o_ref[...] = jnp.broadcast_to(b2_ref[...].astype(jnp.float32), o_ref.shape)

    h = jnp.dot(x_ref[...], w1_ref[...], preferred_element_type=jnp.float32)
    h = h + b1_ref[...].astype(jnp.float32)
    g = _gelu_tanh(h)
    o_ref[...] += jnp.dot(g.astype(w2_ref.dtype), w2_ref[...],
                          preferred_element_type=jnp.float32)


def _ffn_tiled_acc_kernel(x_ref, w1_ref, b1_ref, w2_ref, b2_ref, o_ref, acc_ref):
    """Hidden-dim chunked path, non-f32 output: f32 VMEM scratch accumulator."""
    k = pl.program_id(1)

    @pl.when(k == 0)
    def _():
        acc_ref[...] = jnp.zeros_like(acc_ref)

    h = jnp.dot(x_ref[...], w1_ref[...], preferred_element_type=jnp.float32)
    h = h + b1_ref[...].astype(jnp.float32)
    g = _gelu_tanh(h)
    acc_ref[...] += jnp.dot(g.astype(w2_ref.dtype), w2_ref[...],
                            preferred_element_type=jnp.float32)

    @pl.when(k == pl.num_programs(1) - 1)
    def _():
        o_ref[...] = (acc_ref[...] + b2_ref[...].astype(jnp.float32)).astype(o_ref.dtype)


# --------------------------- config / wrapper --------------------------------


def _round_up(x, m):
    return (x + m - 1) // m * m


_VMEM_CAP_CACHE = []


def _vmem_capacity_bytes():
    if not _VMEM_CAP_CACHE:
        try:
            cap = int(pltpu.get_tpu_info().vmem_capacity_bytes)
        except Exception:
            cap = 64 * 1024 * 1024  # conservative fallback (v7x-sized per-TC VMEM)
        _VMEM_CAP_CACHE.append(cap)
    return _VMEM_CAP_CACHE[0]


def _pick_config(M, D, H, in_b, w_b, out_b, tm, th, force_tiled):
    """Choose (mode, tm_eff, th_eff, Dp, Hp, vmem_limit) from static shapes."""
    cap = _vmem_capacity_bytes()
    vmem_limit = cap * 7 // 8          # headroom under physical VMEM (v7x-safe)
    budget = vmem_limit * 4 // 5       # margin for estimate error / compiler scratch

    Dp = _round_up(D, 128)
    Hp128 = _round_up(H, 128)
    sub = {4: 8, 2: 16, 1: 32}.get(in_b, 8)   # sublane multiple per dtype width
    m_cap = _round_up(M, sub)

    tm_cands = [tm] if tm is not None else [1024, 768, 512, 384, 256, 128, 64, 32, 16, 8]
    th_cands = [th] if th is not None else [1024, 512, 256, 128]

    def fused_bytes(tm_e):
        return (2 * tm_e * Dp * (in_b + out_b)     # double-buffered x / out tiles
                + 2 * 2 * Dp * Hp128 * w_b         # w1 + w2 (conservatively 2x)
                + 4 * (Hp128 + Dp) * w_b           # biases
                + 2 * tm_e * Hp128 * 4)            # f32 hidden / GELU temporaries

    def tiled_bytes(tm_e, th_e, use_acc):
        return (2 * tm_e * Dp * (in_b + out_b)
                + 4 * Dp * th_e * w_b              # w1/w2 chunks, double-buffered
                + 4 * (th_e + Dp) * w_b
                + (tm_e * Dp * 4 if use_acc else 0)
                + 2 * tm_e * th_e * 4)             # f32 hidden / GELU temporaries

    if not force_tiled:
        for tm_c in tm_cands:                      # largest fitting tm wins
            tm_e = _round_up(min(tm_c, m_cap), sub)
            if fused_bytes(tm_e) <= budget:
                return "fused", tm_e, Hp128, Dp, Hp128, vmem_limit

    use_acc = out_b != 4
    for tm_c in tm_cands:                          # prefer big tm, then big th
        tm_e = _round_up(min(tm_c, m_cap), sub)
        for th_c in th_cands:
            th_e = _round_up(min(th_c, Hp128), 128)
            if tiled_bytes(tm_e, th_e, use_acc) <= budget:
                return "tiled", tm_e, th_e, Dp, _round_up(H, th_e), vmem_limit

    # Fallback: smallest tiles even if the (conservative) estimate is over budget.
    tm_e = _round_up(min(2 * sub, m_cap), sub)
    return "tiled", tm_e, 128, Dp, _round_up(H, 128), vmem_limit


@functools.partial(jax.jit,
                   static_argnames=("tm", "th", "compute_dtype", "force_tiled"))
def feed_forward(x, w1, b1, w2, b2, *, tm=None, th=None, compute_dtype=None,
                 force_tiled=False):
    """x: (B, T, D); w1: (D, H); b1: (H,); w2: (H, D); b2: (D,). Returns (B, T, D).

    compute_dtype (e.g. jnp.bfloat16) casts all operands (and the output) for
    full-rate MXU; accumulation stays in f32 via preferred_element_type.
    """
    B, T, D = x.shape
    H = w1.shape[1]
    M = B * T

    if compute_dtype is not None:
        x = x.astype(compute_dtype)
        w1 = w1.astype(compute_dtype)
        b1 = b1.astype(compute_dtype)
        w2 = w2.astype(compute_dtype)
        b2 = b2.astype(compute_dtype)

    out_dtype = x.dtype
    mode, tm_e, th_e, Dp, Hp, vmem_limit = _pick_config(
        M, D, H, x.dtype.itemsize, w1.dtype.itemsize, out_dtype.itemsize,
        tm, th, force_tiled)
    Mp = _round_up(M, tm_e)

    # Zero padding is semantically a no-op: padded x columns / w1 rows contribute 0,
    # GELU(0)=0 rows only touch padded w2 rows (also 0), and padded rows / feature
    # columns are sliced off below. Pads are skipped entirely when already aligned.
    # TODO(synk): pre-pad weights once at model init so this stays off the per-call path.
    x2 = x.reshape(M, D)
    if Mp != M or Dp != D:
        x2 = jnp.pad(x2, ((0, Mp - M), (0, Dp - D)))
    w1p = w1 if (Dp == D and Hp == H) else jnp.pad(w1, ((0, Dp - D), (0, Hp - H)))
    b1p = (b1 if Hp == H else jnp.pad(b1, (0, Hp - H))).reshape(1, Hp)
    w2p = w2 if (Dp == D and Hp == H) else jnp.pad(w2, ((0, Hp - H), (0, Dp - D)))
    b2p = (b2 if Dp == D else jnp.pad(b2, (0, Dp - D))).reshape(1, Dp)

    if mode == "fused":
        out = pl.pallas_call(
            _ffn_fused_kernel,
            out_shape=jax.ShapeDtypeStruct((Mp, Dp), out_dtype),
            grid_spec=pltpu.PrefetchScalarGridSpec(
                num_scalar_prefetch=0,
                grid=(Mp // tm_e,),
                in_specs=[
                    pl.BlockSpec((tm_e, Dp), lambda i: (i, 0)),   # x tile
                    pl.BlockSpec((Dp, Hp), lambda i: (0, 0)),     # w1 (resident)
                    pl.BlockSpec((1, Hp), lambda i: (0, 0)),      # b1
                    pl.BlockSpec((Hp, Dp), lambda i: (0, 0)),     # w2 (resident)
                    pl.BlockSpec((1, Dp), lambda i: (0, 0)),      # b2
                ],
                out_specs=pl.BlockSpec((tm_e, Dp), lambda i: (i, 0)),
            ),
            compiler_params=pltpu.CompilerParams(
                dimension_semantics=("parallel",),
                vmem_limit_bytes=vmem_limit,
            ),
        )(x2, w1p, b1p, w2p, b2p)
    else:
        f32_out = out_dtype == jnp.float32
        kernel = _ffn_tiled_f32out_kernel if f32_out else _ffn_tiled_acc_kernel
        scratch = [] if f32_out else [pltpu.VMEM((tm_e, Dp), jnp.float32)]
        out = pl.pallas_call(
            kernel,
            out_shape=jax.ShapeDtypeStruct((Mp, Dp), out_dtype),
            grid_spec=pltpu.PrefetchScalarGridSpec(
                num_scalar_prefetch=0,
                grid=(Mp // tm_e, Hp // th_e),
                in_specs=[
                    pl.BlockSpec((tm_e, Dp), lambda i, k: (i, 0)),   # x tile
                    pl.BlockSpec((Dp, th_e), lambda i, k: (0, k)),   # w1 chunk
                    pl.BlockSpec((1, th_e), lambda i, k: (0, k)),    # b1 chunk
                    pl.BlockSpec((th_e, Dp), lambda i, k: (k, 0)),   # w2 chunk
                    pl.BlockSpec((1, Dp), lambda i, k: (0, 0)),      # b2
                ],
                out_specs=pl.BlockSpec((tm_e, Dp), lambda i, k: (i, 0)),
                scratch_shapes=scratch,
            ),
            compiler_params=pltpu.CompilerParams(
                dimension_semantics=("parallel", "arbitrary"),
                vmem_limit_bytes=vmem_limit,
            ),
        )(x2, w1p, b1p, w2p, b2p)

    return out[:M, :D].reshape(B, T, D)


# ------------------------------ reference / test ------------------------------


def _ffn_ref(x, w1, b1, w2, b2):
    return _gelu_tanh(x @ w1 + b1) @ w2 + b2


if __name__ == "__main__":
    # Small config consistent with the module: cfg['emb_dim'] = 32.
    batch, seq, emb_dim = 2, 8, 32
    hidden = 4 * emb_dim  # 128

    key = jax.random.PRNGKey(0)
    kx, k1, k2, k3, k4 = jax.random.split(key, 5)

    x = jax.random.normal(kx, (batch, seq, emb_dim), dtype=jnp.float32)
    # Weights stored as (in, out) = W^T of PyTorch Linear.
    w1 = jax.random.normal(k1, (emb_dim, hidden), dtype=jnp.float32) * 0.02
    b1 = jax.random.normal(k2, (hidden,), dtype=jnp.float32) * 0.02
    w2 = jax.random.normal(k3, (hidden, emb_dim), dtype=jnp.float32) * 0.02
    b2 = jax.random.normal(k4, (emb_dim,), dtype=jnp.float32) * 0.02

    # 1) Default path (weights-resident fused kernel at these shapes).
    out = jax.block_until_ready(feed_forward(x, w1, b1, w2, b2))
    ref = _ffn_ref(x.reshape(-1, emb_dim), w1, b1, w2, b2).reshape(batch, seq, emb_dim)
    assert out.shape == (batch, seq, emb_dim)
    assert jnp.allclose(out, ref, atol=2e-3, rtol=2e-2), "fused path mismatch"

    # 2) Force the hidden-chunked path (multi-tile grid on both axes, f32 output
    #    -> accumulates directly into the output tile, no scratch).
    b2_, s2_, d2_, h2_ = 2, 40, 64, 256
    kx2, k5, k6, k7, k8 = jax.random.split(jax.random.PRNGKey(1), 5)
    x_t = jax.random.normal(kx2, (b2_, s2_, d2_), dtype=jnp.float32)
    w1_t = jax.random.normal(k5, (d2_, h2_), dtype=jnp.float32) * 0.02
    b1_t = jax.random.normal(k6, (h2_,), dtype=jnp.float32) * 0.02
    w2_t = jax.random.normal(k7, (h2_, d2_), dtype=jnp.float32) * 0.02
    b2_t = jax.random.normal(k8, (d2_,), dtype=jnp.float32) * 0.02
    out_t = jax.block_until_ready(
        feed_forward(x_t, w1_t, b1_t, w2_t, b2_t, tm=32, th=128, force_tiled=True))
    ref_t = _ffn_ref(x_t.reshape(-1, d2_), w1_t, b1_t, w2_t, b2_t).reshape(b2_, s2_, d2_)
    assert jnp.allclose(out_t, ref_t, atol=2e-3, rtol=2e-2), "tiled path mismatch"

    # 3) bf16 compute path (exercises the f32-scratch accumulator tiled kernel).
    out_bf = jax.block_until_ready(
        feed_forward(x_t, w1_t, b1_t, w2_t, b2_t, tm=32, th=128,
                     force_tiled=True, compute_dtype=jnp.bfloat16))
    assert jnp.allclose(out_bf.astype(jnp.float32), ref_t, atol=2e-2, rtol=2e-1), \
        "bf16 path mismatch"

    print("KERNEL_OK")
</pallas_src>

<mosaic_0001>
module attributes {stable_mosaic.version = 11 : i64} {
  func.func @_ffn_fused_kernel(%arg0: i32, %arg1: memref<16x128xf32, #tpu.memory_space<vmem>>, %arg2: memref<128x128xf32, #tpu.memory_space<vmem>>, %arg3: memref<1x128xf32, #tpu.memory_space<vmem>>, %arg4: memref<128x128xf32, #tpu.memory_space<vmem>>, %arg5: memref<1x128xf32, #tpu.memory_space<vmem>>, %arg6: memref<16x128xf32, #tpu.memory_space<vmem>>) attributes {dimension_semantics = [#tpu.dimension_semantics<parallel>], iteration_bounds = array<i64: 1>, scalar_prefetch = 0 : i64, scratch_operands = 0 : i64, tpu.core_type = #tpu.core_type<tc>, window_params = [{transform_indices = @transform_0, window_bounds = array<i64: 16, 128>}, {pipeline_mode = #tpu.pipeline_mode<synchronous>, transform_indices = @transform_1, window_bounds = array<i64: 128, 128>}, {pipeline_mode = #tpu.pipeline_mode<synchronous>, transform_indices = @transform_2, window_bounds = array<i64: 1, 128>}, {pipeline_mode = #tpu.pipeline_mode<synchronous>, transform_indices = @transform_3, window_bounds = array<i64: 128, 128>}, {pipeline_mode = #tpu.pipeline_mode<synchronous>, transform_indices = @transform_4, window_bounds = array<i64: 1, 128>}, {transform_indices = @transform_5, window_bounds = array<i64: 16, 128>}]} {
    %c0 = arith.constant 0 : index
    %c0_0 = arith.constant 0 : index
    %0 = vector.load %arg1[%c0, %c0_0] : memref<16x128xf32, #tpu.memory_space<vmem>>, vector<16x128xf32>
    %c0_1 = arith.constant 0 : index
    %c0_2 = arith.constant 0 : index
    %1 = vector.load %arg2[%c0_1, %c0_2] : memref<128x128xf32, #tpu.memory_space<vmem>>, vector<128x128xf32>
    %cst = arith.constant dense<0.000000e+00> : vector<16x128xf32>
    %2 = tpu.matmul %0, %1, %cst {dimension_numbers = #tpu.dot_dimension_numbers<[1], [0], [0], [1], [0, 0, 1, 1], [], []>} : vector<16x128xf32>, vector<128x128xf32>, vector<16x128xf32> -> vector<16x128xf32>
    %c0_3 = arith.constant 0 : index
    %c0_4 = arith.constant 0 : index
    %3 = vector.load %arg3[%c0_3, %c0_4] : memref<1x128xf32, #tpu.memory_space<vmem>>, vector<1x128xf32>
    %4 = vector.broadcast %3 : vector<1x128xf32> to vector<16x128xf32>
    %5 = arith.addf %2, %4 : vector<16x128xf32>
    %cst_5 = arith.constant 5.000000e-01 : f32
    %6 = vector.broadcast %cst_5 : f32 to vector<16x128xf32>
    %7 = arith.mulf %6, %5 : vector<16x128xf32>
    %cst_6 = arith.constant 4.471500e-02 : f32
    %8 = vector.broadcast %cst_6 : f32 to vector<16x128xf32>
    %9 = arith.mulf %8, %5 : vector<16x128xf32>
    %10 = arith.mulf %9, %5 : vector<16x128xf32>
    %11 = arith.mulf %10, %5 : vector<16x128xf32>
    %12 = arith.addf %5, %11 : vector<16x128xf32>
    %cst_7 = arith.constant 0.797884583 : f32
    %13 = vector.broadcast %cst_7 : f32 to vector<16x128xf32>
    %14 = arith.mulf %13, %12 : vector<16x128xf32>
    %15 = math.tanh %14 : vector<16x128xf32>
    %cst_8 = arith.constant 1.000000e+00 : f32
    %16 = vector.broadcast %cst_8 : f32 to vector<16x128xf32>
    %17 = arith.addf %16, %15 : vector<16x128xf32>
    %18 = arith.mulf %7, %17 : vector<16x128xf32>
    %c0_9 = arith.constant 0 : index
    %c0_10 = arith.constant 0 : index
    %19 = vector.load %arg4[%c0_9, %c0_10] : memref<128x128xf32, #tpu.memory_space<vmem>>, vector<128x128xf32>
    %cst_11 = arith.constant dense<0.000000e+00> : vector<16x128xf32>
    %20 = tpu.matmul %18, %19, %cst_11 {dimension_numbers = #tpu.dot_dimension_numbers<[1], [0], [0], [1], [0, 0, 1, 1], [], []>} : vector<16x128xf32>, vector<128x128xf32>, vector<16x128xf32> -> vector<16x128xf32>
    %c0_12 = arith.constant 0 : index
    %c0_13 = arith.constant 0 : index
    %21 = vector.load %arg5[%c0_12, %c0_13] : memref<1x128xf32, #tpu.memory_space<vmem>>, vector<1x128xf32>
    %22 = vector.broadcast %21 : vector<1x128xf32> to vector<16x128xf32>
    %23 = arith.addf %20, %22 : vector<16x128xf32>
    %c0_14 = arith.constant 0 : index
    %c0_15 = arith.constant 0 : index
    %24 = vector.load %arg6[%c0_14, %c0_15] : memref<16x128xf32, #tpu.memory_space<vmem>>, vector<16x128xf32>
    tpu.vector_store %arg6[%c0_14, %c0_15], %23 {strides = array<i32>} : memref<16x128xf32, #tpu.memory_space<vmem>>, vector<16x128xf32>,
    return
  }
  func.func @transform_0(%arg0: i32) -> (i32, i32) {
    %c0_i32 = arith.constant 0 : i32
    %c0_i32_0 = arith.constant 0 : i32
    return %arg0, %c0_i32 : i32, i32
  }
  func.func @transform_1(%arg0: i32) -> (i32, i32) {
    %c0_i32 = arith.constant 0 : i32
    %c0_i32_0 = arith.constant 0 : i32
    %c0_i32_1 = arith.constant 0 : i32
    return %c0_i32, %c0_i32_0 : i32, i32
  }
  func.func @transform_2(%arg0: i32) -> (i32, i32) {
    %c0_i32 = arith.constant 0 : i32
    %c0_i32_0 = arith.constant 0 : i32
    %c0_i32_1 = arith.constant 0 : i32
    return %c0_i32, %c0_i32_0 : i32, i32
  }
  func.func @transform_3(%arg0: i32) -> (i32, i32) {
    %c0_i32 = arith.constant 0 : i32
    %c0_i32_0 = arith.constant 0 : i32
    %c0_i32_1 = arith.constant 0 : i32
    return %c0_i32, %c0_i32_0 : i32, i32
  }
  func.func @transform_4(%arg0: i32) -> (i32, i32) {
    %c0_i32 = arith.constant 0 : i32
    %c0_i32_0 = arith.constant 0 : i32
    %c0_i32_1 = arith.constant 0 : i32
    return %c0_i32, %c0_i32_0 : i32, i32
  }
  func.func @transform_5(%arg0: i32) -> (i32, i32) {
    %c0_i32 = arith.constant 0 : i32
    %c0_i32_0 = arith.constant 0 : i32
    return %arg0, %c0_i32 : i32, i32
  }
}

</mosaic_0001>

<llo_original>
// kernel: feed_forward.1
$region0: #{feed_forward.1}
  #allocation0 [shape = 'u32[]', space=smem, size = 0x4, offset = 0x4, fixed_abs, tag = 'smem constant byte address 0x4 - core index']
  #allocation1 [shape = 'u32[144,128]{1,0:T(1,128)}', space=vmem, size = 0x12000, scoped, tag = 'internal scratch']
  %s0 = inlined_call_operand.vmem [shape: f32[16,128], index: 0, kind: input, shape index: {}]
  %s1 = inlined_call_operand.vmem [shape: f32[128,128], index: 1, kind: input, shape index: {}]
  %s2 = inlined_call_operand.vmem [shape: f32[1,128], index: 2, kind: input, shape index: {}]
  %s3 = inlined_call_operand.vmem [shape: f32[128,128], index: 3, kind: input, shape index: {}]
  %s4 = inlined_call_operand.vmem [shape: f32[1,128], index: 4, kind: input, shape index: {}]
  %s5 = inlined_call_operand.vmem [shape: f32[16,128], index: 5, kind: output, shape index: {}]
  %s6 = sld [smem:[#allocation0]]
  $region30: #{feed_forward.1} parent=0
    _
  %s8 = ssub.s32 1, %s6
  %s9 = scalar_select 0, %s8, %s6
  // Predicated region
  $region2: #{feed_forward.1} parent=0 // pred_check
    _
  $region3: #{feed_forward.1} parent=0 // pred_check_branch
    %11 = sbr.rel (0) target = $region5
  $region4: #{feed_forward.1} parent=0 // pred_region
    _
  $region5: #{feed_forward.1} parent=0 // pred_fallthru
    _
  // Predicated region
  $region6: #{feed_forward.1} parent=0 // pred_check
    _
  $region7: #{feed_forward.1} parent=0 // pred_check_branch
    %13 = sbr.rel (0) target = $region9
  $region8: #{feed_forward.1} parent=0 // pred_region
    _
  $region9: #{feed_forward.1} parent=0 // pred_fallthru
    _
  // Predicated region
  $region10: #{feed_forward.1} parent=0 // pred_check
    _
  $region11: #{feed_forward.1} parent=0 // pred_check_branch
    %15 = sbr.rel (0) target = $region13
  $region12: #{feed_forward.1} parent=0 // pred_region
    _
  $region13: #{feed_forward.1} parent=0 // pred_fallthru
    _
  // Predicated region
  $region14: #{feed_forward.1} parent=0 // pred_check
    _
  $region15: #{feed_forward.1} parent=0 // pred_check_branch
    %17 = sbr.rel (0) target = $region17
  $region16: #{feed_forward.1} parent=0 // pred_region
    _
  $region17: #{feed_forward.1} parent=0 // pred_fallthru
    _
  // Predicated region
  $region18: #{feed_forward.1} parent=0 // pred_check
    _
  $region19: #{feed_forward.1} parent=0 // pred_check_branch
    %19 = sbr.rel (0) target = $region21
  $region20: #{feed_forward.1} parent=0 // pred_region
    _
  $region21: #{feed_forward.1} parent=0 // pred_fallthru
    _
  %v20 = vld [vmem:[%s0] sm:$0xff]
  %v21 = vld [vmem:[%s0 + $0x8] sm:$0xff]
  %v22 = vld [vmem:[%s1] sm:$0xff]
  %v23 = vld [vmem:[%s1 + $0x8] sm:$0xff]
  %v24 = vld [vmem:[%s1 + $0x10] sm:$0xff]
  %v25 = vld [vmem:[%s1 + $0x18] sm:$0xff]
  %v26 = vld [vmem:[%s1 + $0x20] sm:$0xff]
  %v27 = vld [vmem:[%s1 + $0x28] sm:$0xff]
  %v28 = vld [vmem:[%s1 + $0x30] sm:$0xff]
  %v29 = vld [vmem:[%s1 + $0x38] sm:$0xff]
  %v30 = vld [vmem:[%s1 + $0x40] sm:$0xff]
  %v31 = vld [vmem:[%s1 + $0x48] sm:$0xff]
  %v32 = vld [vmem:[%s1 + $0x50] sm:$0xff]
  %v33 = vld [vmem:[%s1 + $0x58] sm:$0xff]
  %v34 = vld [vmem:[%s1 + $0x60] sm:$0xff]
  %v35 = vld [vmem:[%s1 + $0x68] sm:$0xff]
  %v36 = vld [vmem:[%s1 + $0x70] sm:$0xff]
  %v37 = vld [vmem:[%s1 + $0x78] sm:$0xff]
  %v38 = vld [vmem:[%s2] sm:$0x1]
  %v40 = vlaneseq
  %v41 = vshrl.u32 %v40, 7
  %v42 = vsub.s32 0, %v41
  %v43 = vrot.slane %v38, %v42
  %45 = vmatprep.subr.mxu0 0.0
  %46 = vmatpush1.msra.mxu0 %v37
  %47 = vmatprep.subr.mxu0 0.0
  %48 = vmatpush1.msra.mxu0 %v36
  %49 = vmatprep.subr.mxu0 0.0
  %50 = vmatpush1.msra.mxu0 %v35
  %51 = vmatprep.subr.mxu0 0.0
  %52 = vmatpush1.msra.mxu0 %v34
  %53 = vmatprep.subr.mxu0 0.0
  %54 = vmatpush1.msra.mxu0 %v33
  %55 = vmatprep.subr.mxu0 0.0
  %56 = vmatpush1.msra.mxu0 %v32
  %57 = vmatprep.subr.mxu0 0.0
  %58 = vmatpush1.msra.mxu0 %v31
  %59 = vmatprep.subr.mxu0 0.0
  %60 = vmatpush1.msra.mxu0 %v30
  %61 = vmatprep.subr.mxu0 0.0
  %62 = vmatpush1.msra.mxu0 %v29
  %63 = vmatprep.subr.mxu0 0.0
  %64 = vmatpush1.msra.mxu0 %v28
  %65 = vmatprep.subr.mxu0 0.0
  %66 = vmatpush1.msra.mxu0 %v27
  %67 = vmatprep.subr.mxu0 0.0
  %68 = vmatpush1.msra.mxu0 %v26
  %69 = vmatprep.subr.mxu0 0.0
  %70 = vmatpush1.msra.mxu0 %v25
  %71 = vmatprep.subr.mxu0 0.0
  %72 = vmatpush1.msra.mxu0 %v24
  %73 = vmatprep.subr.mxu0 0.0
  %74 = vmatpush1.msra.mxu0 %v23
  %75 = vmatprep.subr.mxu0 0.0
  %76 = vmatpush1.msra.mxu0 %v22
  %77 = vmatprep.subr.mxu0 0.0
  %78 = vmatpush2.msra.mxu0 0.0
  %79 = vmatprep.subr.mxu0 0.0
  %80 = vmatpush2.msra.mxu0 0.0
  %81 = vmatprep.subr.mxu0 0.0
  %82 = vmatpush2.msra.mxu0 0.0
  %83 = vmatprep.subr.mxu0 0.0
  %84 = vmatpush2.msra.mxu0 0.0
  %85 = vmatprep.subr.mxu0 0.0
  %86 = vmatpush2.msra.mxu0 0.0
  %87 = vmatprep.subr.mxu0 0.0
  %88 = vmatpush2.msra.mxu0 0.0
  %89 = vmatprep.subr.mxu0 0.0
  %90 = vmatpush2.msra.mxu0 0.0
  %91 = vmatprep.subr.mxu0 0.0
  %92 = vmatpush2.msra.mxu0 0.0
  %93 = vmatprep.subr.mxu0 0.0
  %94 = vmatpush2.msra.mxu0 0.0
  %95 = vmatprep.subr.mxu0 0.0
  %96 = vmatpush2.msra.mxu0 0.0
  %97 = vmatprep.subr.mxu0 0.0
  %98 = vmatpush2.msra.mxu0 0.0
  %99 = vmatprep.subr.mxu0 0.0
  %100 = vmatpush2.msra.mxu0 0.0
  %101 = vmatprep.subr.mxu0 0.0
  %102 = vmatpush2.msra.mxu0 0.0
  %103 = vmatprep.subr.mxu0 0.0
  %104 = vmatpush2.msra.mxu0 0.0
  %105 = vmatprep.subr.mxu0 0.0
  %106 = vmatpush2.msra.mxu0 0.0
  %107 = vmatprep.subr.mxu0 0.0
  %108 = vmatpush2.msra.mxu0 0.0
  %109 = vmatprep.mubr.f32.mxu0 0.0
  %110 = vmatmul.mubr.f32.gmra.mxu0 %v20
  %v111 = vpop.f32.mrf.mxu0
  %v112 = vadd.f32 %v43, %v111
  %v113 = vpop.f32.mrf.mxu0
  %114 = vmatprep.mubr.f32.mxu0 0.0
  %115 = vmatmul.mubr.f32.gmra.mxu0 %v21
  %v116 = vpop.f32.mrf.mxu0
  %v117 = vadd.f32 %v43, %v116
  %v118 = vpop.f32.mrf.mxu0
  %119 = vdwg.mxu0
  %v120 = vmul.f32 %v112, 0.5
  %v121 = vmul.f32 %v117, 0.5
  %v122 = vmul.f32 %v112, 0.044715
  %v123 = vmul.f32 %v117, 0.044715
  %v124 = vmul.f32 %v122, %v112
  %v125 = vmul.f32 %v123, %v117
  %v126 = vmul.f32 %v124, %v112
  %v127 = vmul.f32 %v125, %v117
  %v128 = vadd.f32 %v112, %v126
  %v129 = vadd.f32 %v117, %v127
  %v130 = vmul.f32 %v128, 0.7978846
  %v131 = vmul.f32 %v129, 0.7978846
  %v132 = vtanh.pop %v130
  %v133 = vtanh.pop %v131
  %v134 = vadd.f32 %v132, 1.0
  %v135 = vadd.f32 %v133, 1.0
  %v136 = vmul.f32 %v120, %v134
  %v137 = vmul.f32 %v121, %v135
  %v138 = vld [vmem:[%s3] sm:$0xff]
  %v139 = vld [vmem:[%s3 + $0x8] sm:$0xff]
  %v140 = vld [vmem:[%s3 + $0x10] sm:$0xff]
  %v141 = vld [vmem:[%s3 + $0x18] sm:$0xff]
  %v142 = vld [vmem:[%s3 + $0x20] sm:$0xff]
  %v143 = vld [vmem:[%s3 + $0x28] sm:$0xff]
  %v144 = vld [vmem:[%s3 + $0x30] sm:$0xff]
  %v145 = vld [vmem:[%s3 + $0x38] sm:$0xff]
  %v146 = vld [vmem:[%s3 + $0x40] sm:$0xff]
  %v147 = vld [vmem:[%s3 + $0x48] sm:$0xff]
  %v148 = vld [vmem:[%s3 + $0x50] sm:$0xff]
  %v149 = vld [vmem:[%s3 + $0x58] sm:$0xff]
  %v150 = vld [vmem:[%s3 + $0x60] sm:$0xff]
  %v151 = vld [vmem:[%s3 + $0x68] sm:$0xff]
  %v152 = vld [vmem:[%s3 + $0x70] sm:$0xff]
  %v153 = vld [vmem:[%s3 + $0x78] sm:$0xff]
  %v154 = vld [vmem:[%s4] sm:$0x1]
  %v156 = vlaneseq
  %v157 = vshrl.u32 %v156, 7
  %v158 = vsub.s32 0, %v157
  %v159 = vrot.slane %v154, %v158
  %161 = vmatprep.subr.mxu0 0.0
  %162 = vmatpush1.msra.mxu0 %v153
  %163 = vmatprep.subr.mxu0 0.0
  %164 = vmatpush1.msra.mxu0 %v152
  %165 = vmatprep.subr.mxu0 0.0
  %166 = vmatpush1.msra.mxu0 %v151
  %167 = vmatprep.subr.mxu0 0.0
  %168 = vmatpush1.msra.mxu0 %v150
  %169 = vmatprep.subr.mxu0 0.0
  %170 = vmatpush1.msra.mxu0 %v149
  %171 = vmatprep.subr.mxu0 0.0
  %172 = vmatpush1.msra.mxu0 %v148
  %173 = vmatprep.subr.mxu0 0.0
  %174 = vmatpush1.msra.mxu0 %v147
  %175 = vmatprep.subr.mxu0 0.0
  %176 = vmatpush1.msra.mxu0 %v146
  %177 = vmatprep.subr.mxu0 0.0
  %178 = vmatpush1.msra.mxu0 %v145
  %179 = vmatprep.subr.mxu0 0.0
  %180 = vmatpush1.msra.mxu0 %v144
  %181 = vmatprep.subr.mxu0 0.0
  %182 = vmatpush1.msra.mxu0 %v143
  %183 = vmatprep.subr.mxu0 0.0
  %184 = vmatpush1.msra.mxu0 %v142
  %185 = vmatprep.subr.mxu0 0.0
  %186 = vmatpush1.msra.mxu0 %v141
  %187 = vmatprep.subr.mxu0 0.0
  %188 = vmatpush1.msra.mxu0 %v140
  %189 = vmatprep.subr.mxu0 0.0
  %190 = vmatpush1.msra.mxu0 %v139
  %191 = vmatprep.subr.mxu0 0.0
  %192 = vmatpush1.msra.mxu0 %v138
  %193 = vmatprep.subr.mxu0 0.0
  %194 = vmatpush2.msra.mxu0 0.0
  %195 = vmatprep.subr.mxu0 0.0
  %196 = vmatpush2.msra.mxu0 0.0
  %197 = vmatprep.subr.mxu0 0.0
  %198 = vmatpush2.msra.mxu0 0.0
  %199 = vmatprep.subr.mxu0 0.0
  %200 = vmatpush2.msra.mxu0 0.0
  %201 = vmatprep.subr.mxu0 0.0
  %202 = vmatpush2.msra.mxu0 0.0
  %203 = vmatprep.subr.mxu0 0.0
  %204 = vmatpush2.msra.mxu0 0.0
  %205 = vmatprep.subr.mxu0 0.0
  %206 = vmatpush2.msra.mxu0 0.0
  %207 = vmatprep.subr.mxu0 0.0
  %208 = vmatpush2.msra.mxu0 0.0
  %209 = vmatprep.subr.mxu0 0.0
  %210 = vmatpush2.msra.mxu0 0.0
  %211 = vmatprep.subr.mxu0 0.0
  %212 = vmatpush2.msra.mxu0 0.0
  %213 = vmatprep.subr.mxu0 0.0
  %214 = vmatpush2.msra.mxu0 0.0
  %215 = vmatprep.subr.mxu0 0.0
  %216 = vmatpush2.msra.mxu0 0.0
  %217 = vmatprep.subr.mxu0 0.0
  %218 = vmatpush2.msra.mxu0 0.0
  %219 = vmatprep.subr.mxu0 0.0
  %220 = vmatpush2.msra.mxu0 0.0
  %221 = vmatprep.subr.mxu0 0.0
  %222 = vmatpush2.msra.mxu0 0.0
  %223 = vmatprep.subr.mxu0 0.0
  %224 = vmatpush2.msra.mxu0 0.0
  %225 = vmatprep.mubr.f32.mxu0 0.0
  %226 = vmatmul.mubr.f32.gmra.mxu0 %v136
  %v227 = vpop.f32.mrf.mxu0
  %v228 = vadd.f32 %v159, %v227
  %v229 = vpop.f32.mrf.mxu0
  %230 = vmatprep.mubr.f32.mxu0 0.0
  %231 = vmatmul.mubr.f32.gmra.mxu0 %v137
  %v232 = vpop.f32.mrf.mxu0
  %v233 = vadd.f32 %v159, %v232
  %v234 = vpop.f32.mrf.mxu0
  %235 = vdwg.mxu0
  %236 = vst [vmem:[%s5] sm:$0xff] %v228
  %237 = vst [vmem:[%s5 + $0x8] sm:$0xff] %v233
  // Predicated region
  $region22: #{feed_forward.1} parent=0 // pred_check
    _
  $region23: #{feed_forward.1} parent=0 // pred_check_branch
    %239 = sbr.rel (0) target = $region25
  $region24: #{feed_forward.1} parent=0 // pred_region
    _
  $region25: #{feed_forward.1} parent=0 // pred_fallthru
    _
  // Predicated region
  $region26: #{feed_forward.1} parent=0 // pred_check
    _
  $region27: #{feed_forward.1} parent=0 // pred_check_branch
    %241 = sbr.rel (0) target = $region29
  $region28: #{feed_forward.1} parent=0 // pred_region
    _
  $region29: #{feed_forward.1} parent=0 // pred_fallthru
    _

</llo_original>
